<compile_context>
chip_gen: v7x
topology: tpu7x:2x2x1
jax: 0.10.0
libtpu: 0.0.40
codegen_flags: <defaults>
</compile_context>

<pallas_src>
import functools

import jax
import jax.numpy as jnp
from jax import lax
from jax.experimental import pallas as pl
from jax.experimental.pallas import tpu as pltpu


def _round_up(x, m):
    return (x + m - 1) // m * m


def _matmul_bn_lrelu_kernel(p_ref, w_ref, shift_ref, o_ref, *, neg_slope):
    # p_ref:     (1, TM, Kp)       im2col patch rows for TM output pixels (zero padded K)
    # w_ref:     (Kp, Cout_p)      conv weights with BN scale folded in (zero padded)
    # shift_ref: (1, Cout_p)       folded BN shift  = beta + scale * (conv_bias - mean)
    # o_ref:     (1, TM, Cout_p)   lane-dense output slab
    acc = jnp.dot(p_ref[0], w_ref[...], preferred_element_type=jnp.float32)
    y = acc + shift_ref[...]                       # broadcast (1, Cout_p)
    y = jnp.where(y > 0, y, neg_slope * y)         # leaky_relu(0.2)
    o_ref[...] = y.reshape(o_ref.shape).astype(o_ref.dtype)


def conv_bn_leaky_relu2d(x_nchw, weight_oihw, conv_bias, bn_gamma, bn_beta,
                         bn_mean, bn_var, *, stride=1, padding=1, dilation=1,
                         groups=1, eps=1e-5, neg_slope=0.2, tm=128):
    """Forward of ConvBnLeakyRelu2d (stride=1, dilation=1, groups=1).

    x_nchw:      (N, Cin, H, W)
    weight_oihw: (Cout, Cin, KH, KW)   (PyTorch layout)
    returns:     (N, Cout, Ho, Wo)     (same as the PyTorch module)
    """
    if stride != 1 or dilation != 1 or groups != 1:
        raise NotImplementedError("only stride=1, dilation=1, groups=1 are supported")

    N, Cin, H, W = x_nchw.shape
    Cout, Cin_w, KH, KW = weight_oihw.shape
    assert Cin_w == Cin, "grouped conv not supported"

    Ho = H + 2 * padding - KH + 1
    Wo = W + 2 * padding - KW + 1
    M = Ho * Wo
    K = KH * KW * Cin
    Kp = _round_up(K, 128)            # lane-dense contraction dim for the MXU
    Cout_p = _round_up(Cout, 128)     # lane-dense output stores

    f32 = jnp.float32

    # ---- glue (plain JAX / XLA): BN folding + im2col patch slab ----
    scale = bn_gamma.astype(f32) / jnp.sqrt(bn_var.astype(f32) + eps)           # (Cout,)
    shift = bn_beta.astype(f32) + scale * (conv_bias.astype(f32) - bn_mean.astype(f32))

    w_hwio = jnp.transpose(weight_oihw, (2, 3, 1, 0)).astype(f32)               # (KH,KW,Cin,Cout)
    w_folded = (w_hwio * scale).reshape(K, Cout).astype(x_nchw.dtype)           # fold BN scale
    w_folded = jnp.pad(w_folded, ((0, Kp - K), (0, Cout_p - Cout)))             # (Kp, Cout_p)
    shift_p = jnp.pad(shift, (0, Cout_p - Cout)).reshape(1, Cout_p)             # (1, Cout_p)

    x_nhwc = jnp.transpose(x_nchw, (0, 2, 3, 1))
    x_pad = jnp.pad(x_nhwc, ((0, 0), (padding, padding), (padding, padding), (0, 0)))
    taps = [x_pad[:, kh:kh + Ho, kw:kw + Wo, :] for kh in range(KH) for kw in range(KW)]
    patches = jnp.concatenate(taps, axis=-1).reshape(N, M, K)   # K order = (kh, kw, cin)
    patches = jnp.pad(patches, ((0, 0), (0, 0), (0, Kp - K)))   # (N, M, Kp)

    tm_eff = min(tm, M)               # full-extent if the image is tiny
    mt = pl.cdiv(M, tm_eff)

    out = pl.pallas_call(
        functools.partial(_matmul_bn_lrelu_kernel, neg_slope=neg_slope),
        out_shape=jax.ShapeDtypeStruct((N, M, Cout_p), x_nchw.dtype),
        grid_spec=pltpu.PrefetchScalarGridSpec(
            num_scalar_prefetch=0,
            grid=(N, mt),
            in_specs=[
                pl.BlockSpec((1, tm_eff, Kp), lambda n, m: (n, m, 0)),
                pl.BlockSpec((Kp, Cout_p), lambda n, m: (0, 0)),     # weights stay resident
                pl.BlockSpec((1, Cout_p), lambda n, m: (0, 0)),
            ],
            out_specs=pl.BlockSpec((1, tm_eff, Cout_p), lambda n, m: (n, m, 0)),
        ),
        compiler_params=pltpu.CompilerParams(
            dimension_semantics=("parallel", "parallel"),
        ),
    )(patches, w_folded, shift_p)

    out = out[:, :, :Cout].reshape(N, Ho, Wo, Cout)
    return jnp.transpose(out, (0, 3, 1, 2))                          # NHWC -> NCHW


def _reference(x_nchw, weight_oihw, conv_bias, bn_gamma, bn_beta, bn_mean, bn_var,
               *, padding=1, eps=1e-5, neg_slope=0.2):
    y = lax.conv_general_dilated(
        x_nchw, weight_oihw,
        window_strides=(1, 1),
        padding=[(padding, padding), (padding, padding)],
        dimension_numbers=("NCHW", "OIHW", "NCHW"),
    )
    y = y + conv_bias[None, :, None, None]
    scale = bn_gamma / jnp.sqrt(bn_var + eps)
    y = scale[None, :, None, None] * (y - bn_mean[None, :, None, None]) \
        + bn_beta[None, :, None, None]
    return jnp.where(y > 0, y, neg_slope * y)


if __name__ == "__main__":
    key = jax.random.PRNGKey(0)
    N, Cin, Cout, H, W = 2, 4, 8, 16, 16
    KH = KW = 3

    k_x, k_w, k_b, k_g, k_bt, k_m, k_v = jax.random.split(key, 7)
    x = jax.random.normal(k_x, (N, Cin, H, W), dtype=jnp.float32)
    weight = jax.random.normal(k_w, (Cout, Cin, KH, KW), dtype=jnp.float32) * 0.1
    conv_bias = jax.random.normal(k_b, (Cout,), dtype=jnp.float32) * 0.1
    bn_gamma = 1.0 + 0.1 * jax.random.normal(k_g, (Cout,), dtype=jnp.float32)
    bn_beta = 0.1 * jax.random.normal(k_bt, (Cout,), dtype=jnp.float32)
    bn_mean = 0.1 * jax.random.normal(k_m, (Cout,), dtype=jnp.float32)
    bn_var = jnp.abs(jax.random.normal(k_v, (Cout,), dtype=jnp.float32)) + 0.5

    out = conv_bn_leaky_relu2d(x, weight, conv_bias, bn_gamma, bn_beta, bn_mean, bn_var)
    out = jax.block_until_ready(out)

    ref = _reference(x, weight, conv_bias, bn_gamma, bn_beta, bn_mean, bn_var)
    assert out.shape == (N, Cout, H, W)
    assert jnp.allclose(out, ref, atol=1e-4, rtol=1e-4), \
        f"max abs err = {jnp.max(jnp.abs(out - ref))}"

    print("KERNEL_OK")
</pallas_src>

<mosaic_0001>
module attributes {stable_mosaic.version = 11 : i64} {
  func.func @_matmul_bn_lrelu_kernel(%arg0: i32, %arg1: i32, %arg2: memref<1x128x128xf32, #tpu.memory_space<vmem>>, %arg3: memref<128x128xf32, #tpu.memory_space<vmem>>, %arg4: memref<1x128xf32, #tpu.memory_space<vmem>>, %arg5: memref<1x128x128xf32, #tpu.memory_space<vmem>>) attributes {dimension_semantics = [#tpu.dimension_semantics<parallel>, #tpu.dimension_semantics<parallel>], iteration_bounds = array<i64: 2, 2>, scalar_prefetch = 0 : i64, scratch_operands = 0 : i64, tpu.core_type = #tpu.core_type<tc>, window_params = [{transform_indices = @transform_0, window_bounds = array<i64: 1, 128, 128>}, {pipeline_mode = #tpu.pipeline_mode<synchronous>, transform_indices = @transform_1, window_bounds = array<i64: 128, 128>}, {pipeline_mode = #tpu.pipeline_mode<synchronous>, transform_indices = @transform_2, window_bounds = array<i64: 1, 128>}, {transform_indices = @transform_3, window_bounds = array<i64: 1, 128, 128>}]} {
    %c0 = arith.constant 0 : index
    %c0_0 = arith.constant 0 : index
    %c0_1 = arith.constant 0 : index
    %0 = vector.load %arg2[%c0, %c0_0, %c0_1] : memref<1x128x128xf32, #tpu.memory_space<vmem>>, vector<1x128x128xf32>
    %1 = vector.shape_cast %0 : vector<1x128x128xf32> to vector<128x128xf32>
    %c0_2 = arith.constant 0 : index
    %c0_3 = arith.constant 0 : index
    %2 = vector.load %arg3[%c0_2, %c0_3] : memref<128x128xf32, #tpu.memory_space<vmem>>, vector<128x128xf32>
    %cst = arith.constant dense<0.000000e+00> : vector<128x128xf32>
    %3 = tpu.matmul %1, %2, %cst {dimension_numbers = #tpu.dot_dimension_numbers<[1], [0], [0], [1], [0, 0, 1, 1], [], []>} : vector<128x128xf32>, vector<128x128xf32>, vector<128x128xf32> -> vector<128x128xf32>
    %c0_4 = arith.constant 0 : index
    %c0_5 = arith.constant 0 : index
    %4 = vector.load %arg4[%c0_4, %c0_5] : memref<1x128xf32, #tpu.memory_space<vmem>>, vector<1x128xf32>
    %5 = vector.broadcast %4 : vector<1x128xf32> to vector<128x128xf32>
    %6 = arith.addf %3, %5 : vector<128x128xf32>
    %cst_6 = arith.constant 0.000000e+00 : f32
    %7 = vector.broadcast %cst_6 : f32 to vector<128x128xf32>
    %8 = arith.cmpf ogt, %6, %7 : vector<128x128xf32>
    %cst_7 = arith.constant 2.000000e-01 : f32
    %9 = vector.broadcast %cst_7 : f32 to vector<128x128xf32>
    %10 = arith.mulf %9, %6 : vector<128x128xf32>
    %11 = arith.select %8, %6, %10 : vector<128x128xi1>, vector<128x128xf32>
    %12 = vector.shape_cast %11 : vector<128x128xf32> to vector<1x128x128xf32>
    %c0_8 = arith.constant 0 : index
    %c0_9 = arith.constant 0 : index
    %c0_10 = arith.constant 0 : index
    %13 = vector.load %arg5[%c0_8, %c0_9, %c0_10] : memref<1x128x128xf32, #tpu.memory_space<vmem>>, vector<1x128x128xf32>
    tpu.vector_store %arg5[%c0_8, %c0_9, %c0_10], %12 {strides = array<i32>} : memref<1x128x128xf32, #tpu.memory_space<vmem>>, vector<1x128x128xf32>,
    return
  }
  func.func @transform_0(%arg0: i32, %arg1: i32) -> (i32, i32, i32) {
    %c0_i32 = arith.constant 0 : i32
    %c0_i32_0 = arith.constant 0 : i32
    return %arg0, %arg1, %c0_i32 : i32, i32, i32
  }
  func.func @transform_1(%arg0: i32, %arg1: i32) -> (i32, i32) {
    %c0_i32 = arith.constant 0 : i32
    %c0_i32_0 = arith.constant 0 : i32
    %c0_i32_1 = arith.constant 0 : i32
    return %c0_i32, %c0_i32_0 : i32, i32
  }
  func.func @transform_2(%arg0: i32, %arg1: i32) -> (i32, i32) {
    %c0_i32 = arith.constant 0 : i32
    %c0_i32_0 = arith.constant 0 : i32
    %c0_i32_1 = arith.constant 0 : i32
    return %c0_i32, %c0_i32_0 : i32, i32
  }
  func.func @transform_3(%arg0: i32, %arg1: i32) -> (i32, i32, i32) {
    %c0_i32 = arith.constant 0 : i32
    %c0_i32_0 = arith.constant 0 : i32
    return %arg0, %arg1, %c0_i32 : i32, i32, i32
  }
}

</mosaic_0001>

<llo_original>
// kernel: tpu_custom_call.1
$region0: #{tpu_custom_call.1}
  #allocation0 [shape = 'u32[]', space=smem, size = 0x4, offset = 0x4, fixed_abs, tag = 'smem constant byte address 0x4 - core index']
  #allocation1 [shape = 'u32[144,128]{1,0:T(1,128)}', space=vmem, size = 0x12000, scoped, tag = 'internal scratch']
  %s0 = inlined_call_operand.hbm [shape: f32[2,256,128], index: 0, kind: input, shape index: {}]
  %s1 = inlined_call_operand.hbm [shape: f32[128,128], index: 1, kind: input, shape index: {}]
  %s2 = inlined_call_operand.vmem [shape: f32[1,128], index: 2, kind: input, shape index: {}]
  %s3 = inlined_call_operand.hbm [shape: f32[2,256,128], index: 3, kind: output, shape index: {}]
  %s4 = sld [smem:[#allocation0]]
  $region53: #{tpu_custom_call.1} parent=0
    _
  %s6 = ssub.s32 1, %s4
  %s7 = scalar_select 0, %s6, %s4
  $region1: #{tpu_custom_call.1} parent=0
    #allocation2 [shape = 'u8[131072]{0}', space=vmem, size = 0x20000, scoped, tag = 'input window, operand 0']
    #allocation3 [shape = 's32[2]{0}', space=sflag, size = 0x8, scoped, tag = 'scoped memory for tpu_custom_call.1']
    #allocation4 [shape = 's32[2]{0}', space=sflag, size = 0x8, scoped, tag = 'scoped memory for tpu_custom_call.1']
    #allocation5 [shape = 'u8[65536]{0}', space=vmem, size = 0x10000, scoped, tag = 'input window, operand 1, single buffered']
    #allocation6 [shape = 's32[1]{0}', space=sflag, size = 0x4, scoped, tag = 'scoped memory for tpu_custom_call.1']
    #allocation7 [shape = 'u8[131072]{0}', space=vmem, size = 0x20000, scoped, tag = 'output window, operand 0']
    %8 = vsyncpa [#allocation3], 0
    %s9 = scalar_lea.sflag [#allocation3], 1
    %10 = vsyncpa %s9, 0
    %11 = vsyncpa [#allocation6], 0
    %12 = vsyncpa [#allocation4], 0
    %s13 = scalar_lea.sflag [#allocation4], 1
    %14 = vsyncpa %s13, 0
    loop: start=0, step=1, limit=6
    $region2: #{tpu_custom_call.1} parent=1 // loop_pre_header
      _
    $region3: #{tpu_custom_call.1} parent=1 // loop_header
      %s16 = sphi 0, %s20
      %p17 = scmp.ge.s32.totalorder %s16, 6
      %s23 = sphi 0, %s35
      %s24 = sphi 0, %s31
      %s25 = sphi 0, %s23
      %s26 = sphi 0, %s24
      %s27 = sphi 0, %s25
      %s28 = sphi 0, %s26
      %s40 = sphi 0, %s42
      %s43 = sphi 0, %s40
      %s44 = sphi 0, %s43
      %s60 = sphi 0, %s44
      %s64 = sphi 0, %s64
      %s66 = sphi 0, %s64
      %s67 = sphi 0, %s66
      %s81 = sphi 0, %s67
      %s85 = sphi 0, %s85
      %s87 = sphi 0, %s85
      %s88 = sphi 0, %s87
      %s102 = sphi 0, %s88
      %s110 = sphi 0, %s112
      %s113 = sphi 0, %s110
      %s114 = sphi 0, %s113
      %s130 = sphi 0, %s114
    $region4: #{tpu_custom_call.1} parent=1 // loop_header_branch
      %19 = sbr.rel (%p17) target = $region8
    $region5: #{tpu_custom_call.1} parent=1 // loop_body
      %s21 = ssub.s32 %s16, 1
      %s22 = ssub.s32 %s16, 2
      %s29 = sadd.s32 1, %s24
      %p30 = scmp.ge.s32.totalorder %s29, 2
      %s31 = scalar_select %p30, 0, %s29
      %s32 = sadd.s32 1, %s23
      %s33 = scalar_select %p30, %s32, %s23
      %p34 = scmp.ge.s32.totalorder %s33, 2
      %s35 = scalar_select %p34, 0, %s33
      %s36 = ssub.s32 %s23, %s35
      %s37 = ssub.s32 %s24, %s31
      %s38 = sor.u32 %s36, %s37
      %p39 = scmp.eq.s32.totalorder %s38, 0
      %s41 = sadd.s32 %s40, 1
      %s42 = scalar_select %p39, %s40, %s41
      %p45 = pneg %p39
      %p46 = scmp.eq.s32.totalorder %s16, 3
      %p47 = por %p45, %p46
      %p48 = scmp.ne.s32.totalorder %s40, %s43
      %p49 = scmp.eq.s32.totalorder %s16, 0
      %p50 = por %p48, %p49
      %p51 = scmp.ne.s32.totalorder %s40, %s43
      %p52 = scmp.eq.s32.totalorder %s21, 3
      %p53 = por %p51, %p52
      %p54 = scmp.ne.s32.totalorder %s43, %s44
      %p55 = scmp.eq.s32.totalorder %s21, 0
      %p56 = por %p54, %p55
      %p57 = scmp.ne.s32.totalorder %s43, %s44
      %p58 = scmp.eq.s32.totalorder %s22, 3
      %p59 = por %p57, %p58
      %p61 = scmp.ne.s32.totalorder %s44, %s60
      %p62 = scmp.eq.s32.totalorder %s22, 0
      %p63 = por %p61, %p62
      %s65 = sadd.s32 %s64, 1
      %p68 = scmp.eq.s32.totalorder %s16, 3
      %p69 = scmp.ne.s32.totalorder %s64, %s66
      %p70 = scmp.eq.s32.totalorder %s16, 0
      %p71 = por %p69, %p70
      %p72 = scmp.ne.s32.totalorder %s64, %s66
      %p73 = scmp.eq.s32.totalorder %s21, 3
      %p74 = por %p72, %p73
      %p75 = scmp.ne.s32.totalorder %s66, %s67
      %p76 = scmp.eq.s32.totalorder %s21, 0
      %p77 = por %p75, %p76
      %p78 = scmp.ne.s32.totalorder %s66, %s67
      %p79 = scmp.eq.s32.totalorder %s22, 3
      %p80 = por %p78, %p79
      %p82 = scmp.ne.s32.totalorder %s67, %s81
      %p83 = scmp.eq.s32.totalorder %s22, 0
      %p84 = por %p82, %p83
      %s86 = sadd.s32 %s85, 1
      %p89 = scmp.eq.s32.totalorder %s16, 3
      %p90 = scmp.ne.s32.totalorder %s85, %s87
      %p91 = scmp.eq.s32.totalorder %s16, 0
      %p92 = por %p90, %p91
      %p93 = scmp.ne.s32.totalorder %s85, %s87
      %p94 = scmp.eq.s32.totalorder %s21, 3
      %p95 = por %p93, %p94
      %p96 = scmp.ne.s32.totalorder %s87, %s88
      %p97 = scmp.eq.s32.totalorder %s21, 0
      %p98 = por %p96, %p97
      %p99 = scmp.ne.s32.totalorder %s87, %s88
      %p100 = scmp.eq.s32.totalorder %s22, 3
      %p101 = por %p99, %p100
      %p103 = scmp.ne.s32.totalorder %s88, %s102
      %p104 = scmp.eq.s32.totalorder %s22, 0
      %p105 = por %p103, %p104
      %s106 = ssub.s32 %s23, %s35
      %s107 = ssub.s32 %s24, %s31
      %s108 = sor.u32 %s106, %s107
      %p109 = scmp.eq.s32.totalorder %s108, 0
      %s111 = sadd.s32 %s110, 1
      %s112 = scalar_select %p109, %s110, %s111
      %p115 = pneg %p109
      %p116 = scmp.eq.s32.totalorder %s16, 3
      %p117 = por %p115, %p116
      %p118 = scmp.ne.s32.totalorder %s110, %s113
      %p119 = scmp.eq.s32.totalorder %s16, 0
      %p120 = por %p118, %p119
      %p121 = scmp.ne.s32.totalorder %s110, %s113
      %p122 = scmp.eq.s32.totalorder %s21, 3
      %p123 = por %p121, %p122
      %p124 = scmp.ne.s32.totalorder %s113, %s114
      %p125 = scmp.eq.s32.totalorder %s21, 0
      %p126 = por %p124, %p125
      %p127 = scmp.ne.s32.totalorder %s113, %s114
      %p128 = scmp.eq.s32.totalorder %s22, 3
      %p129 = por %p127, %p128
      %p131 = scmp.ne.s32.totalorder %s114, %s130
      %p132 = scmp.eq.s32.totalorder %s22, 0
      %p133 = por %p131, %p132
      %p134 = scmp.le.s32.totalorder 1, %s16
      %p135 = scmp.lt.s32.totalorder %s16, 5
      %p136 = pnand %p134, %p135
      %p137 = pneg %p136
      // Predicated region
      $region9: #{tpu_custom_call.1} parent=5 // pred_check
        _
      $region10: #{tpu_custom_call.1} parent=5 // pred_check_branch
        %139 = sbr.rel (%p136) target = $region12
      $region11: #{tpu_custom_call.1} parent=5 // pred_region
        %s140 = ssub.s32 %s16, 1
        // Predicated region
        $region13: #{tpu_custom_call.1} parent=11 // pred_check
          %p141 = pneg %p77
        $region14: #{tpu_custom_call.1} parent=11 // pred_check_branch
          %143 = sbr.rel (%p141) target = $region16
        $region15: #{tpu_custom_call.1} parent=11 // pred_region
          %s145 = ssub.s32 2048, 2048
          %146 = vsyncadd [#allocation6], %s145
          %s147 = sshll.u32 [#allocation5], 4
          %s148 = int_to_ptr.vmem [resolvable:$true] %s147
          %153 = dma.hbm_to_vmem [thread:$0]  %s1, 2048, %s148, [#allocation6], 128, 128, 8
        $region16: #{tpu_custom_call.1} parent=11 // pred_fallthru
          _
        // Predicated region
        $region17: #{tpu_custom_call.1} parent=11 // pred_check
          %p154 = pneg %p98
        $region18: #{tpu_custom_call.1} parent=11 // pred_check_branch
          %156 = sbr.rel (%p154) target = $region20
        $region19: #{tpu_custom_call.1} parent=11 // pred_region
          _
        $region20: #{tpu_custom_call.1} parent=11 // pred_fallthru
          _
      $region12: #{tpu_custom_call.1} parent=5 // pred_fallthru
        _
      %p157 = scmp.lt.s32.totalorder %s16, 4
      // Predicated region
      $region21: #{tpu_custom_call.1} parent=5 // pred_check
        %p158 = pneg %p157
      $region22: #{tpu_custom_call.1} parent=5 // pred_check_branch
        %160 = sbr.rel (%p158) target = $region24
      $region23: #{tpu_custom_call.1} parent=5 // pred_region
        // Predicated region
        $region25: #{tpu_custom_call.1} parent=23 // pred_check
          %p161 = pneg %p50
        $region26: #{tpu_custom_call.1} parent=23 // pred_check_branch
          %163 = sbr.rel (%p161) target = $region28
        $region27: #{tpu_custom_call.1} parent=23 // pred_region
          %s164 = sand.u32 %s40, 1
          %s165 = scalar_lea.sflag [#allocation3], %s164
          %s166 = sand.u32 %s40, 1
          %s167 = smul.addr %s166, 128
          %s168 = scalar_lea.vmem [#allocation2], %s167
          %s169 = smul.u32 16, %s24
          %s171 = ssub.s32 2048, 2048
          %172 = vsyncadd %s165, %s171
          %s173 = smul.addr %s23, 32
          %s174 = sadd.s32 %s169, %s173
          %s175 = smul.addr %s174, 128
          %s176 = scalar_lea.hbm %s0, %s175
          %s177 = sshll.u32 %s168, 4
          %s178 = int_to_ptr.vmem [resolvable:$true] %s177
          %183 = dma.hbm_to_vmem [thread:$0]  %s176, 2048, %s178, %s165, 128, 128, 8
        $region28: #{tpu_custom_call.1} parent=23 // pred_fallthru
          _
      $region24: #{tpu_custom_call.1} parent=5 // pred_fallthru
        _
      %p184 = scmp.le.s32.totalorder 1, %s16
      %p185 = scmp.lt.s32.totalorder %s16, 5
      %p186 = pnand %p184, %p185
      %p187 = pneg %p186
      // Predicated region
      $region29: #{tpu_custom_call.1} parent=5 // pred_check
        _
      $region30: #{tpu_custom_call.1} parent=5 // pred_check_branch
        %189 = sbr.rel (%p186) target = $region32
      $region31: #{tpu_custom_call.1} parent=5 // pred_region
        %s190 = ssub.s32 %s16, 1
        %s191 = sand.u32 %s43, 1
        %s192 = scalar_lea.sflag [#allocation3], %s191
        %s193 = sand.u32 %s43, 1
        %s194 = smul.addr %s193, 128
        %s195 = scalar_lea.vmem [#allocation2], %s194
        // Predicated region
        $region33: #{tpu_custom_call.1} parent=31 // pred_check
          %p196 = pneg %p56
        $region34: #{tpu_custom_call.1} parent=31 // pred_check_branch
          %198 = sbr.rel (%p196) target = $region36
        $region35: #{tpu_custom_call.1} parent=31 // pred_region
          %199 = dma.done %s192, 2048
        $region36: #{tpu_custom_call.1} parent=31 // pred_fallthru
          _
        // Predicated region
        $region37: #{tpu_custom_call.1} parent=31 // pred_check
          %p200 = pneg %p77
        $region38: #{tpu_custom_call.1} parent=31 // pred_check_branch
          %202 = sbr.rel (%p200) target = $region40
        $region39: #{tpu_custom_call.1} parent=31 // pred_region
          %203 = dma.done [#allocation6], 2048
        $region40: #{tpu_custom_call.1} parent=31 // pred_fallthru
          _
        %s204 = sand.u32 %s43, 1
        %s205 = scalar_lea.sflag [#allocation3], %s204
        %s206 = sand.u32 %s43, 1
        %s207 = smul.addr %s206, 128
        %s208 = scalar_lea.vmem [#allocation2], %s207
        %p209 = pneg %p56
        %p210 = pneg %p53
        %p211 = pneg %p77
        %p212 = pneg %p74
        %p213 = pneg %p98
        %p214 = pneg %p95
        %p215 = pneg %p126
        %p216 = pneg %p123
        %s217 = sand.u32 %s113, 1
        %s218 = scalar_lea.sflag [#allocation4], %s217
        %s219 = sand.u32 %s113, 1
        %s220 = smul.addr %s219, 128
        %s221 = scalar_lea.vmem [#allocation7], %s220
        %s222 = smul.u32 16, %s26
        %s223 = smul.u32 16, %s26
        %v224 = vld [vmem:[%s195] sm:$0xff]
        %v225 = vld [vmem:[%s195 + $0x8] sm:$0xff]
        %v226 = vld [vmem:[%s195 + $0x10] sm:$0xff]
        %v227 = vld [vmem:[%s195 + $0x18] sm:$0xff]
        %v228 = vld [vmem:[%s195 + $0x20] sm:$0xff]
        %v229 = vld [vmem:[%s195 + $0x28] sm:$0xff]
        %v230 = vld [vmem:[%s195 + $0x30] sm:$0xff]
        %v231 = vld [vmem:[%s195 + $0x38] sm:$0xff]
        %v232 = vld [vmem:[%s195 + $0x40] sm:$0xff]
        %v233 = vld [vmem:[%s195 + $0x48] sm:$0xff]
        %v234 = vld [vmem:[%s195 + $0x50] sm:$0xff]
        %v235 = vld [vmem:[%s195 + $0x58] sm:$0xff]
        %v236 = vld [vmem:[%s195 + $0x60] sm:$0xff]
        %v237 = vld [vmem:[%s195 + $0x68] sm:$0xff]
        %v238 = vld [vmem:[%s195 + $0x70] sm:$0xff]
        %v239 = vld [vmem:[%s195 + $0x78] sm:$0xff]
        %v240 = vld [vmem:[#allocation5] sm:$0xff]
        %v241 = vld [vmem:[#allocation5 + $0x8] sm:$0xff]
        %v242 = vld [vmem:[#allocation5 + $0x10] sm:$0xff]
        %v243 = vld [vmem:[#allocation5 + $0x18] sm:$0xff]
        %v244 = vld [vmem:[#allocation5 + $0x20] sm:$0xff]
        %v245 = vld [vmem:[#allocation5 + $0x28] sm:$0xff]
        %v246 = vld [vmem:[#allocation5 + $0x30] sm:$0xff]
        %v247 = vld [vmem:[#allocation5 + $0x38] sm:$0xff]
        %v248 = vld [vmem:[#allocation5 + $0x40] sm:$0xff]
        %v249 = vld [vmem:[#allocation5 + $0x48] sm:$0xff]
        %v250 = vld [vmem:[#allocation5 + $0x50] sm:$0xff]
        %v251 = vld [vmem:[#allocation5 + $0x58] sm:$0xff]
        %v252 = vld [vmem:[#allocation5 + $0x60] sm:$0xff]
        %v253 = vld [vmem:[#allocation5 + $0x68] sm:$0xff]
        %v254 = vld [vmem:[#allocation5 + $0x70] sm:$0xff]
        %v255 = vld [vmem:[#allocation5 + $0x78] sm:$0xff]
        %v256 = vld [vmem:[%s2] sm:$0x1]
        %v258 = vlaneseq
        %v259 = vshrl.u32 %v258, 7
        %v260 = vsub.s32 0, %v259
        %v261 = vrot.slane %v256, %v260
        %263 = vmatprep.subr.mxu0 0.0
        %264 = vmatpush1.msra.mxu0 %v240
        %265 = vmatprep.subr.mxu0 0.0
        %266 = vmatpush1.msra.mxu0 %v241
        %267 = vmatprep.subr.mxu0 0.0
        %268 = vmatpush1.msra.mxu0 %v242
        %269 = vmatprep.subr.mxu0 0.0
        %270 = vmatpush1.msra.mxu0 %v243
        %271 = vmatprep.subr.mxu0 0.0
        %272 = vmatpush1.msra.mxu0 %v244
        %273 = vmatprep.subr.mxu0 0.0
        %274 = vmatpush1.msra.mxu0 %v245
        %275 = vmatprep.subr.mxu0 0.0
        %276 = vmatpush1.msra.mxu0 %v246
        %277 = vmatprep.subr.mxu0 0.0
        %278 = vmatpush1.msra.mxu0 %v247
        %279 = vmatprep.subr.mxu0 0.0
        %280 = vmatpush1.msra.mxu0 %v248
        %281 = vmatprep.subr.mxu0 0.0
        %282 = vmatpush1.msra.mxu0 %v249
        %283 = vmatprep.subr.mxu0 0.0
        %284 = vmatpush1.msra.mxu0 %v250
        %285 = vmatprep.subr.mxu0 0.0
        %286 = vmatpush1.msra.mxu0 %v251
        %287 = vmatprep.subr.mxu0 0.0
        %288 = vmatpush1.msra.mxu0 %v252
        %289 = vmatprep.subr.mxu0 0.0
        %290 = vmatpush1.msra.mxu0 %v253
        %291 = vmatprep.subr.mxu0 0.0
        %292 = vmatpush1.msra.mxu0 %v254
        %293 = vmatprep.subr.mxu0 0.0
        %294 = vmatpush1.msra.mxu0 %v255
        %295 = vmatprep.subr.mxu0 0.0
        %296 = vmatpush1.msra.mxu0 0.0
        %297 = vmatprep.subr.mxu0 0.0
        %298 = vmatpush1.msra.mxu0 0.0
        %299 = vmatprep.subr.mxu0 0.0
        %300 = vmatpush1.msra.mxu0 0.0
        %301 = vmatprep.subr.mxu0 0.0
        %302 = vmatpush1.msra.mxu0 0.0
        %303 = vmatprep.subr.mxu0 0.0
        %304 = vmatpush1.msra.mxu0 0.0
        %305 = vmatprep.subr.mxu0 0.0
        %306 = vmatpush1.msra.mxu0 0.0
        %307 = vmatprep.subr.mxu0 0.0
        %308 = vmatpush1.msra.mxu0 0.0
        %309 = vmatprep.subr.mxu0 0.0
        %310 = vmatpush1.msra.mxu0 0.0
        %311 = vmatprep.subr.mxu0 0.0
        %312 = vmatpush1.msra.mxu0 0.0
        %313 = vmatprep.subr.mxu0 0.0
        %314 = vmatpush1.msra.mxu0 0.0
        %315 = vmatprep.subr.mxu0 0.0
        %316 = vmatpush1.msra.mxu0 0.0
        %317 = vmatprep.subr.mxu0 0.0
        %318 = vmatpush1.msra.mxu0 0.0
        %319 = vmatprep.subr.mxu0 0.0
        %320 = vmatpush1.msra.mxu0 0.0
        %321 = vmatprep.subr.mxu0 0.0
        %322 = vmatpush1.msra.mxu0 0.0
        %323 = vmatprep.subr.mxu0 0.0
        %324 = vmatpush1.msra.mxu0 0.0
        %325 = vmatprep.subr.mxu0 0.0
        %326 = vmatpush1.msra.mxu0 0.0
        %327 = vmatprep.mubr.f32.mxu0 0.0
        %328 = vmatmul.mubr.f32.gmra.mrb[0].mxu0 %v224
        %v329 = vpop.f32.mrb[0].mxu0
        %v330 = vadd.f32 %v261, %v329
        %v331 = vpop.f32.mrb[0].mxu0
        %332 = vmatprep.mubr.f32.mxu0 0.0
        %333 = vmatmul.mubr.f32.gmra.mrb[0].mxu0 %v225
        %v334 = vpop.f32.mrb[0].mxu0
        %v335 = vadd.f32 %v261, %v334
        %v336 = vpop.f32.mrb[0].mxu0
        %337 = vmatprep.mubr.f32.mxu0 0.0
        %338 = vmatmul.mubr.f32.gmra.mrb[0].mxu0 %v226
        %v339 = vpop.f32.mrb[0].mxu0
        %v340 = vadd.f32 %v261, %v339
        %v341 = vpop.f32.mrb[0].mxu0
        %342 = vmatprep.mubr.f32.mxu0 0.0
        %343 = vmatmul.mubr.f32.gmra.mrb[0].mxu0 %v227
        %v344 = vpop.f32.mrb[0].mxu0
        %v345 = vadd.f32 %v261, %v344
        %v346 = vpop.f32.mrb[0].mxu0
        %347 = vmatprep.mubr.f32.mxu0 0.0
        %348 = vmatmul.mubr.f32.gmra.mrb[0].mxu0 %v228
        %v349 = vpop.f32.mrb[0].mxu0
        %v350 = vadd.f32 %v261, %v349
        %v351 = vpop.f32.mrb[0].mxu0
        %352 = vmatprep.mubr.f32.mxu0 0.0
        %353 = vmatmul.mubr.f32.gmra.mrb[0].mxu0 %v229
        %v354 = vpop.f32.mrb[0].mxu0
        %v355 = vadd.f32 %v261, %v354
        %v356 = vpop.f32.mrb[0].mxu0
        %357 = vmatprep.mubr.f32.mxu0 0.0
        %358 = vmatmul.mubr.f32.gmra.mrb[0].mxu0 %v230
        %v359 = vpop.f32.mrb[0].mxu0
        %v360 = vadd.f32 %v261, %v359
        %v361 = vpop.f32.mrb[0].mxu0
        %362 = vmatprep.mubr.f32.mxu0 0.0
        %363 = vmatmul.mubr.f32.gmra.mrb[0].mxu0 %v231
        %v364 = vpop.f32.mrb[0].mxu0
        %v365 = vadd.f32 %v261, %v364
        %v366 = vpop.f32.mrb[0].mxu0
        %367 = vmatprep.mubr.f32.mxu0 0.0
        %368 = vmatmul.mubr.f32.gmra.mrb[0].mxu0 %v232
        %v369 = vpop.f32.mrb[0].mxu0
        %v370 = vadd.f32 %v261, %v369
        %v371 = vpop.f32.mrb[0].mxu0
        %372 = vmatprep.mubr.f32.mxu0 0.0
        %373 = vmatmul.mubr.f32.gmra.mrb[0].mxu0 %v233
        %v374 = vpop.f32.mrb[0].mxu0
        %v375 = vadd.f32 %v261, %v374
        %v376 = vpop.f32.mrb[0].mxu0
        %377 = vmatprep.mubr.f32.mxu0 0.0
        %378 = vmatmul.mubr.f32.gmra.mrb[0].mxu0 %v234
        %v379 = vpop.f32.mrb[0].mxu0
        %v380 = vadd.f32 %v261, %v379
        %v381 = vpop.f32.mrb[0].mxu0
        %382 = vmatprep.mubr.f32.mxu0 0.0
        %383 = vmatmul.mubr.f32.gmra.mrb[0].mxu0 %v235
        %v384 = vpop.f32.mrb[0].mxu0
        %v385 = vadd.f32 %v261, %v384
        %v386 = vpop.f32.mrb[0].mxu0
        %387 = vmatprep.mubr.f32.mxu0 0.0
        %388 = vmatmul.mubr.f32.gmra.mrb[0].mxu0 %v236
        %v389 = vpop.f32.mrb[0].mxu0
        %v390 = vadd.f32 %v261, %v389
        %v391 = vpop.f32.mrb[0].mxu0
        %392 = vmatprep.mubr.f32.mxu0 0.0
        %393 = vmatmul.mubr.f32.gmra.mrb[0].mxu0 %v237
        %v394 = vpop.f32.mrb[0].mxu0
        %v395 = vadd.f32 %v261, %v394
        %v396 = vpop.f32.mrb[0].mxu0
        %397 = vmatprep.mubr.f32.mxu0 0.0
        %398 = vmatmul.mubr.f32.gmra.mrb[0].mxu0 %v238
        %v399 = vpop.f32.mrb[0].mxu0
        %v400 = vadd.f32 %v261, %v399
        %v401 = vpop.f32.mrb[0].mxu0
        %402 = vmatprep.mubr.f32.mxu0 0.0
        %403 = vmatmul.mubr.f32.gmra.mrb[0].mxu0 %v239
        %v404 = vpop.f32.mrb[0].mxu0
        %v405 = vadd.f32 %v261, %v404
        %v406 = vpop.f32.mrb[0].mxu0
        %407 = vdwg.mxu0
        %vm408 = vcmp.gt.f32.partialorder %v330, 0.0
        %vm409 = vcmp.gt.f32.partialorder %v335, 0.0
        %vm410 = vcmp.gt.f32.partialorder %v340, 0.0
        %vm411 = vcmp.gt.f32.partialorder %v345, 0.0
        %vm412 = vcmp.gt.f32.partialorder %v350, 0.0
        %vm413 = vcmp.gt.f32.partialorder %v355, 0.0
        %vm414 = vcmp.gt.f32.partialorder %v360, 0.0
        %vm415 = vcmp.gt.f32.partialorder %v365, 0.0
        %vm416 = vcmp.gt.f32.partialorder %v370, 0.0
        %vm417 = vcmp.gt.f32.partialorder %v375, 0.0
        %vm418 = vcmp.gt.f32.partialorder %v380, 0.0
        %vm419 = vcmp.gt.f32.partialorder %v385, 0.0
        %vm420 = vcmp.gt.f32.partialorder %v390, 0.0
        %vm421 = vcmp.gt.f32.partialorder %v395, 0.0
        %vm422 = vcmp.gt.f32.partialorder %v400, 0.0
        %vm423 = vcmp.gt.f32.partialorder %v405, 0.0
        %v424 = vmul.f32 %v330, 0.2
        %v425 = vmul.f32 %v335, 0.2
        %v426 = vmul.f32 %v340, 0.2
        %v427 = vmul.f32 %v345, 0.2
        %v428 = vmul.f32 %v350, 0.2
        %v429 = vmul.f32 %v355, 0.2
        %v430 = vmul.f32 %v360, 0.2
        %v431 = vmul.f32 %v365, 0.2
        %v432 = vmul.f32 %v370, 0.2
        %v433 = vmul.f32 %v375, 0.2
        %v434 = vmul.f32 %v380, 0.2
        %v435 = vmul.f32 %v385, 0.2
        %v436 = vmul.f32 %v390, 0.2
        %v437 = vmul.f32 %v395, 0.2
        %v438 = vmul.f32 %v400, 0.2
        %v439 = vmul.f32 %v405, 0.2
        %v440 = vsel %vm408, %v330, %v424
        %v441 = vsel %vm409, %v335, %v425
        %v442 = vsel %vm410, %v340, %v426
        %v443 = vsel %vm411, %v345, %v427
        %v444 = vsel %vm412, %v350, %v428
        %v445 = vsel %vm413, %v355, %v429
        %v446 = vsel %vm414, %v360, %v430
        %v447 = vsel %vm415, %v365, %v431
        %v448 = vsel %vm416, %v370, %v432
        %v449 = vsel %vm417, %v375, %v433
        %v450 = vsel %vm418, %v380, %v434
        %v451 = vsel %vm419, %v385, %v435
        %v452 = vsel %vm420, %v390, %v436
        %v453 = vsel %vm421, %v395, %v437
        %v454 = vsel %vm422, %v400, %v438
        %v455 = vsel %vm423, %v405, %v439
        %456 = vst [vmem:[%s221] sm:$0xff] %v440
        %457 = vst [vmem:[%s221 + $0x8] sm:$0xff] %v441
        %458 = vst [vmem:[%s221 + $0x10] sm:$0xff] %v442
        %459 = vst [vmem:[%s221 + $0x18] sm:$0xff] %v443
        %460 = vst [vmem:[%s221 + $0x20] sm:$0xff] %v444
        %461 = vst [vmem:[%s221 + $0x28] sm:$0xff] %v445
        %462 = vst [vmem:[%s221 + $0x30] sm:$0xff] %v446
        %463 = vst [vmem:[%s221 + $0x38] sm:$0xff] %v447
        %464 = vst [vmem:[%s221 + $0x40] sm:$0xff] %v448
        %465 = vst [vmem:[%s221 + $0x48] sm:$0xff] %v449
        %466 = vst [vmem:[%s221 + $0x50] sm:$0xff] %v450
        %467 = vst [vmem:[%s221 + $0x58] sm:$0xff] %v451
        %468 = vst [vmem:[%s221 + $0x60] sm:$0xff] %v452
        %469 = vst [vmem:[%s221 + $0x68] sm:$0xff] %v453
        %470 = vst [vmem:[%s221 + $0x70] sm:$0xff] %v454
        %471 = vst [vmem:[%s221 + $0x78] sm:$0xff] %v455
        %s472 = sand.u32 %s113, 1
        %s473 = scalar_lea.sflag [#allocation4], %s472
        %s474 = sand.u32 %s113, 1
        %s475 = smul.addr %s474, 128
        %s476 = scalar_lea.vmem [#allocation7], %s475
        // Predicated region
        $region41: #{tpu_custom_call.1} parent=31 // pred_check
          %p477 = pneg %p123
        $region42: #{tpu_custom_call.1} parent=31 // pred_check_branch
          %479 = sbr.rel (%p477) target = $region44
        $region43: #{tpu_custom_call.1} parent=31 // pred_region
          %s480 = smul.u32 16, %s26
          %s482 = ssub.s32 2048, 2048
          %483 = vsyncadd %s473, %s482
          %s484 = smul.addr %s25, 32
          %s485 = sadd.s32 %s480, %s484
          %s486 = smul.addr %s485, 128
          %s487 = scalar_lea.hbm %s3, %s486
          %s488 = sshll.u32 %s476, 4
          %s489 = int_to_ptr.vmem [resolvable:$true] %s488
          %494 = dma.vmem_to_hbm [thread:$0]  %s489, 2048, %s487, %s473, 128, 128, 8
        $region44: #{tpu_custom_call.1} parent=31 // pred_fallthru
          _
      $region32: #{tpu_custom_call.1} parent=5 // pred_fallthru
        _
      %p495 = scmp.le.s32.totalorder 2, %s16
      // Predicated region
      $region45: #{tpu_custom_call.1} parent=5 // pred_check
        %p496 = pneg %p495
      $region46: #{tpu_custom_call.1} parent=5 // pred_check_branch
        %498 = sbr.rel (%p496) target = $region48
      $region47: #{tpu_custom_call.1} parent=5 // pred_region
        %s499 = ssub.s32 %s16, 2
        // Predicated region
        $region49: #{tpu_custom_call.1} parent=47 // pred_check
          %p500 = pneg %p129
        $region50: #{tpu_custom_call.1} parent=47 // pred_check_branch
          %502 = sbr.rel (%p500) target = $region52
        $region51: #{tpu_custom_call.1} parent=47 // pred_region
          %s503 = sand.u32 %s114, 1
          %s504 = scalar_lea.sflag [#allocation4], %s503
          %s505 = sand.u32 %s114, 1
          %s506 = smul.addr %s505, 128
          %s507 = scalar_lea.vmem [#allocation7], %s506
          %508 = dma.done %s504, 2048
        $region52: #{tpu_custom_call.1} parent=47 // pred_fallthru
          _
      $region48: #{tpu_custom_call.1} parent=5 // pred_fallthru
        _
    $region6: #{tpu_custom_call.1} parent=1 // loop_footer
      %s20 = sadd.s32 1, %s16
    $region7: #{tpu_custom_call.1} parent=1 // loop_footer_branch
      %15 = sbr.rel target = $region3
    $region8: #{tpu_custom_call.1} parent=1 // loop_exit
      _
    %509 = vsyncpa [#allocation3], 1
    %s510 = scalar_lea.sflag [#allocation3], 1
    %511 = vsyncpa %s510, 1
    %512 = vsyncpa [#allocation6], 1
    %513 = vsyncpa [#allocation4], 1
    %s514 = scalar_lea.sflag [#allocation4], 1
    %515 = vsyncpa %s514, 1

</llo_original>
